<compile_context>
chip_gen: v7x
topology: tpu7x:2x2x1
jax: 0.10.0
libtpu: 0.0.40
codegen_flags: <defaults>
</compile_context>

<pallas_src>
import functools

import jax
import jax.numpy as jnp
from jax.experimental import pallas as pl
from jax.experimental.pallas import tpu as pltpu


# ---------------------------------------------------------------------------
# Single fused kernel.
#
# Packed ("guarded") activation layout, lane width WLp >= B*(T+K-1):
#   column b*(T+K-1) + pad_lo + t  <-  sample (b, t)     (valid data)
#   all other columns              <-  zeros             ('same'-conv halo)
# Every conv layer keeps this layout: tap k of the conv is a lane rotation of
# the whole slab (pltpu.roll), so each conv is K accumulated MXU matmuls and
# the layer output is already in the guarded layout once the statically-known
# invalid columns are re-zeroed.  Intermediates never leave VMEM/vregs.
# ---------------------------------------------------------------------------
def _generator_fused_kernel(z_ref, w0_ref, b0_ref, w1_ref, b1_ref,
                            w2_ref, b2_ref, o_ref, *,
                            B, T, K, act_alpha, eps=1e-8):
    T_pad = T + K - 1
    pad_lo = (K - 1) // 2
    WLp = z_ref.shape[1]                       # padded packed lane width

    # Statically-known valid-column mask (halo / lane-pad columns invalid).
    col = jax.lax.broadcasted_iota(jnp.int32, (1, WLp), 1)
    valid = None
    for b in range(B):                         # B tiny -> static unroll
        lo = b * T_pad + pad_lo
        in_b = (col >= lo) & (col < lo + T)
        valid = in_b if valid is None else (valid | in_b)

    def pixel_norm(x):
        # Channel (sublane) reduction on the MXU (ones-row matmul) so the XLU
        # is not spent on sublane rotate-reduces; rsqrt goes to the EUP.
        c = x.shape[0]
        ones = jnp.ones((1, c), jnp.float32)
        sumsq = jnp.dot(ones, x * x, preferred_element_type=jnp.float32)
        return x * jax.lax.rsqrt(sumsq * (1.0 / c) + eps)

    def leaky_relu(x):
        return jnp.where(x >= 0, x, act_alpha * x)

    def conv_same(x, w_ref, b_ref):
        # x: (c_in, WLp) f32 guarded layout.  w_ref: (K, c_out, c_in) bf16.
        # out[:, j] = sum_k W_k @ x[:, j + k - pad_lo]  (valid j never wraps;
        # wrapped / straddling columns are invalid and re-masked afterwards).
        h = None
        for k in range(K):
            shift = (pad_lo - k) % WLp
            xs = x if shift == 0 else pltpu.roll(x, shift=shift, axis=1)
            d = jnp.dot(w_ref[k], xs.astype(jnp.bfloat16),
                        preferred_element_type=jnp.float32)
            h = d if h is None else h + d
        return h + b_ref[...]                  # (c_out, 1) bias broadcast add

    # ---- normalize_latents -> GBlock conv0 -> conv1 -> to_rgb -> tanh ----
    x0 = pixel_norm(z_ref[...])                          # zero halos stay zero
    h0 = pixel_norm(leaky_relu(conv_same(x0, w0_ref, b0_ref)))
    h0 = jnp.where(valid, h0, 0.0)                       # re-zero halo columns
    h1 = pixel_norm(leaky_relu(conv_same(h0, w1_ref, b1_ref)))
    # to_rgb: 1x1 conv (linear, act_alpha=-1); tanh_scale pre-folded in w2/b2.
    rgb = jnp.dot(w2_ref[...], h1.astype(jnp.bfloat16),
                  preferred_element_type=jnp.float32) + b2_ref[...]
    o_ref[...] = jnp.tanh(rgb)                 # lane-dense (C_rgb, WLp) store


# ---------------------------------------------------------------------------
# Wrapper-side (trace-time) packing helper.
# ---------------------------------------------------------------------------
def _pack_latents(z, K, lane_width):
    """(B, C, T) -> (C, lane_width) packed layout with per-batch zero halos."""
    B, C, T = z.shape
    pad_lo = (K - 1) // 2
    pad_hi = K - 1 - pad_lo
    zt = jnp.transpose(z, (1, 0, 2))                        # (C, B, T)
    zp = jnp.pad(zt, ((0, 0), (0, 0), (pad_lo, pad_hi)))    # (C, B, T+K-1)
    flat = zp.reshape(C, B * (T + K - 1))
    return jnp.pad(flat, ((0, 0), (0, lane_width - flat.shape[1])))


# ---------------------------------------------------------------------------
# Generator.forward (depth == 0, conv_only=True, y=None path).
# ---------------------------------------------------------------------------
@functools.partial(jax.jit, static_argnames=("act_alpha", "tanh_scale"))
def generator_forward(params, z, act_alpha=0.2, tanh_scale=0.5):
    assert z.ndim == 3, "conv_only=True requires a 3-D latent (B, latent, T)"
    B, _, T = z.shape
    K, C_hid, C_in = params["conv0_w"].shape
    C_out = params["conv1_w"].shape[1]
    C_rgb = params["rgb_w"].shape[1]
    assert K % 2 == 1, "guarded packed layout assumes an odd ('same') kernel"

    T_pad = T + K - 1
    pad_lo = (K - 1) // 2
    WL = B * T_pad
    WLp = max(128, ((WL + 127) // 128) * 128)     # lane-dense packed width

    # Single fused block: everything stays VMEM-resident.  Fail loudly if B/T
    # grow past a conservative budget instead of silently overflowing VMEM.
    # TODO(synk): add a time-tiled grid (512-lane tiles with K-1 halo, marked
    # "parallel" to use both v7x TensorCores) once this assert trips.
    vmem_est = 4 * WLp * (C_in + 3 * C_hid + C_out + C_rgb)
    assert vmem_est < 16 * 1024 * 1024, f"fused block too large: {vmem_est} B"

    z_packed = _pack_latents(z, K, WLp)                          # (C_in, WLp)
    w0 = params["conv0_w"].astype(jnp.bfloat16)                  # (K,C_hid,C_in)
    b0 = params["conv0_b"].reshape(C_hid, 1).astype(jnp.float32)
    w1 = params["conv1_w"].astype(jnp.bfloat16)                  # (K,C_out,C_hid)
    b1 = params["conv1_b"].reshape(C_out, 1).astype(jnp.float32)
    # ScaledTanh scale folded into the (linear) to_rgb weights/bias.
    w2 = (tanh_scale * params["rgb_w"][0]).astype(jnp.bfloat16)  # (C_rgb,C_out)
    b2 = (tanh_scale * params["rgb_b"]).reshape(C_rgb, 1).astype(jnp.float32)

    kernel = functools.partial(_generator_fused_kernel,
                               B=B, T=T, K=K, act_alpha=act_alpha)

    slab = pl.pallas_call(
        kernel,
        out_shape=jax.ShapeDtypeStruct((C_rgb, WLp), jnp.float32),
        grid_spec=pltpu.PrefetchScalarGridSpec(
            num_scalar_prefetch=0,
            grid=(1,),
            in_specs=[
                pl.BlockSpec(z_packed.shape, lambda i: (0, 0)),
                pl.BlockSpec(w0.shape, lambda i: (0, 0, 0)),
                pl.BlockSpec(b0.shape, lambda i: (0, 0)),
                pl.BlockSpec(w1.shape, lambda i: (0, 0, 0)),
                pl.BlockSpec(b1.shape, lambda i: (0, 0)),
                pl.BlockSpec(w2.shape, lambda i: (0, 0)),
                pl.BlockSpec(b2.shape, lambda i: (0, 0)),
            ],
            out_specs=pl.BlockSpec((C_rgb, WLp), lambda i: (0, 0)),
        ),
        compiler_params=pltpu.CompilerParams(
            dimension_semantics=("arbitrary",)),
    )(z_packed, w0, b0, w1, b1, w2, b2)

    # Lane-dense slab -> (B, C_rgb, T): cheap wrapper-side XLA layout plumbing.
    rgb = slab[:, :WL].reshape(C_rgb, B, T_pad)[:, :, pad_lo:pad_lo + T]
    rgb = jnp.transpose(rgb, (1, 0, 2))
    # _wrap_output with rgb_generation_mode='pggan' -> just the last rgb.
    return ({"x": rgb, "y": None}, {})


# ---------------------------------------------------------------------------
# Parameter construction (deterministic, He-style normal init, zero bias).
# ---------------------------------------------------------------------------
def nf(stage, fmap_base=64, fmap_min=8, fmap_max=32):
    return min(max(int(fmap_base / 2.0 ** stage), fmap_min), fmap_max)


def init_generator_params(key, *, latent_size, k_size, ch_rgb):
    ch_out = nf(1)   # GBlock(latent, nf(1)): hidden == ch_out when deep=False

    def conv_init(key, k, c_out, c_in):
        std = (2.0 / (c_in * k)) ** 0.5
        w = jax.random.normal(key, (k, c_out, c_in), jnp.float32) * std
        b = jnp.zeros((c_out,), jnp.float32)
        return w, b

    k0, k1, k2 = jax.random.split(key, 3)
    params = {}
    params["conv0_w"], params["conv0_b"] = conv_init(k0, k_size, ch_out, latent_size)
    params["conv1_w"], params["conv1_b"] = conv_init(k1, k_size, ch_out, ch_out)
    params["rgb_w"], params["rgb_b"] = conv_init(k2, 1, ch_rgb, ch_out)
    return params


# ---------------------------------------------------------------------------
# Pure-JAX (non-Pallas) reference of the same forward, for verification.
# ---------------------------------------------------------------------------
def reference_forward(params, z, act_alpha=0.2, tanh_scale=0.5):
    def pixel_norm(x):
        return x * jax.lax.rsqrt(jnp.mean(x * x, axis=1, keepdims=True) + 1e-8)

    def conv1d_same(x, w, b):
        K = w.shape[0]
        pad_lo = (K - 1) // 2
        xp = jnp.pad(x, ((0, 0), (0, 0), (pad_lo, K - 1 - pad_lo)))
        T = x.shape[2]
        out = b[None, :, None]
        for k in range(K):
            out = out + jnp.einsum("oc,bct->bot", w[k], xp[:, :, k:k + T])
        return out

    def lrelu(x):
        return jnp.where(x >= 0, x, act_alpha * x)

    h = pixel_norm(z)
    h = pixel_norm(lrelu(conv1d_same(h, params["conv0_w"], params["conv0_b"])))
    h = pixel_norm(lrelu(conv1d_same(h, params["conv1_w"], params["conv1_b"])))
    return jnp.tanh(tanh_scale * conv1d_same(h, params["rgb_w"], params["rgb_b"]))


if __name__ == "__main__":
    B, LATENT, T = 2, 32, 16
    K_SIZE = 3
    CH_RGB = 4

    key = jax.random.PRNGKey(0)
    pkey, zkey = jax.random.split(key)
    params = init_generator_params(pkey, latent_size=LATENT,
                                   k_size=K_SIZE, ch_rgb=CH_RGB)

    z = jax.random.normal(zkey, (B, LATENT, T), jnp.float32)

    (out, attn_maps) = generator_forward(params, z)
    rgb = jax.block_until_ready(out["x"])

    assert rgb.shape == (B, CH_RGB, T), rgb.shape
    assert rgb.dtype == jnp.float32
    assert bool(jnp.all(jnp.isfinite(rgb)))
    assert attn_maps == {}

    # Numerical check against the pure-JAX f32 reference.  Tolerance accounts
    # for bf16 matmul operands (f32 accumulation); structural/indexing bugs
    # would produce O(0.3+) errors and still fail loudly.
    ref = reference_forward(params, z)
    max_err = float(jnp.max(jnp.abs(rgb - ref)))
    assert max_err < 7.5e-2, max_err

    print("KERNEL_OK")
</pallas_src>

<mosaic_0001>
module attributes {stable_mosaic.version = 11 : i64} {
  func.func @_generator_fused_kernel(%arg0: i32, %arg1: memref<32x128xf32, #tpu.memory_space<vmem>>, %arg2: memref<3x32x32xbf16, #tpu.memory_space<vmem>>, %arg3: memref<32x1xf32, #tpu.memory_space<vmem>>, %arg4: memref<3x32x32xbf16, #tpu.memory_space<vmem>>, %arg5: memref<32x1xf32, #tpu.memory_space<vmem>>, %arg6: memref<4x32xbf16, #tpu.memory_space<vmem>>, %arg7: memref<4x1xf32, #tpu.memory_space<vmem>>, %arg8: memref<4x128xf32, #tpu.memory_space<vmem>>) attributes {dimension_semantics = [#tpu.dimension_semantics<arbitrary>], iteration_bounds = array<i64: 1>, scalar_prefetch = 0 : i64, scratch_operands = 0 : i64, tpu.core_type = #tpu.core_type<tc>, window_params = [{pipeline_mode = #tpu.pipeline_mode<synchronous>, transform_indices = @transform_0, window_bounds = array<i64: 32, 128>}, {pipeline_mode = #tpu.pipeline_mode<synchronous>, transform_indices = @transform_1, window_bounds = array<i64: 3, 32, 32>}, {pipeline_mode = #tpu.pipeline_mode<synchronous>, transform_indices = @transform_2, window_bounds = array<i64: 32, 1>}, {pipeline_mode = #tpu.pipeline_mode<synchronous>, transform_indices = @transform_3, window_bounds = array<i64: 3, 32, 32>}, {pipeline_mode = #tpu.pipeline_mode<synchronous>, transform_indices = @transform_4, window_bounds = array<i64: 32, 1>}, {pipeline_mode = #tpu.pipeline_mode<synchronous>, transform_indices = @transform_5, window_bounds = array<i64: 4, 32>}, {pipeline_mode = #tpu.pipeline_mode<synchronous>, transform_indices = @transform_6, window_bounds = array<i64: 4, 1>}, {pipeline_mode = #tpu.pipeline_mode<synchronous>, transform_indices = @transform_7, window_bounds = array<i64: 4, 128>}]} {
    %0 = tpu.iota {dimensions = array<i32: 1>} : vector<1x128xi32>
    %c1_i32 = arith.constant 1 : i32
    %1 = vector.broadcast %c1_i32 : i32 to vector<1x128xi32>
    %2 = arith.cmpi sge, %0, %1 : vector<1x128xi32>
    %c17_i32 = arith.constant 17 : i32
    %3 = vector.broadcast %c17_i32 : i32 to vector<1x128xi32>
    %4 = arith.cmpi slt, %0, %3 : vector<1x128xi32>
    %5 = arith.andi %2, %4 : vector<1x128xi1>
    %c19_i32 = arith.constant 19 : i32
    %6 = vector.broadcast %c19_i32 : i32 to vector<1x128xi32>
    %7 = arith.cmpi sge, %0, %6 : vector<1x128xi32>
    %c35_i32 = arith.constant 35 : i32
    %8 = vector.broadcast %c35_i32 : i32 to vector<1x128xi32>
    %9 = arith.cmpi slt, %0, %8 : vector<1x128xi32>
    %10 = arith.andi %7, %9 : vector<1x128xi1>
    %11 = arith.ori %5, %10 : vector<1x128xi1>
    %c0 = arith.constant 0 : index
    %c0_0 = arith.constant 0 : index
    %12 = vector.load %arg1[%c0, %c0_0] : memref<32x128xf32, #tpu.memory_space<vmem>>, vector<32x128xf32>
    %cst = arith.constant 1.000000e+00 : f32
    %13 = vector.broadcast %cst : f32 to vector<1x32xf32>
    %14 = arith.mulf %12, %12 : vector<32x128xf32>
    %cst_1 = arith.constant dense<0.000000e+00> : vector<1x128xf32>
    %15 = tpu.matmul %13, %14, %cst_1 {dimension_numbers = #tpu.dot_dimension_numbers<[1], [0], [0], [1], [0, 0, 1, 1], [], []>} : vector<1x32xf32>, vector<32x128xf32>, vector<1x128xf32> -> vector<1x128xf32>
    %cst_2 = arith.constant 3.125000e-02 : f32
    %16 = vector.broadcast %cst_2 : f32 to vector<1x128xf32>
    %17 = arith.mulf %15, %16 : vector<1x128xf32>
    %cst_3 = arith.constant 9.99999993E-9 : f32
    %18 = vector.broadcast %cst_3 : f32 to vector<1x128xf32>
    %19 = arith.addf %17, %18 : vector<1x128xf32>
    %20 = math.rsqrt %19 : vector<1x128xf32>
    %21 = vector.broadcast %20 : vector<1x128xf32> to vector<32x128xf32>
    %22 = arith.mulf %12, %21 : vector<32x128xf32>
    %c1_i32_4 = arith.constant 1 : i32
    %23 = tpu.dynamic_rotate %22 by %c1_i32_4 dim 1 : vector<32x128xf32>, i32 -> vector<32x128xf32>
    %c0_5 = arith.constant 0 : index
    %c0_6 = arith.constant 0 : index
    %c0_7 = arith.constant 0 : index
    %24 = vector.load %arg2[%c0_5, %c0_6, %c0_7] : memref<3x32x32xbf16, #tpu.memory_space<vmem>>, vector<1x32x32xbf16>
    %25 = vector.shape_cast %24 : vector<1x32x32xbf16> to vector<32x32xbf16>
    %26 = arith.truncf %23 : vector<32x128xf32> to vector<32x128xbf16>
    %cst_8 = arith.constant dense<0.000000e+00> : vector<32x128xf32>
    %27 = tpu.matmul %25, %26, %cst_8 {dimension_numbers = #tpu.dot_dimension_numbers<[1], [0], [0], [1], [0, 0, 1, 1], [], []>} : vector<32x32xbf16>, vector<32x128xbf16>, vector<32x128xf32> -> vector<32x128xf32>
    %c1 = arith.constant 1 : index
    %c0_9 = arith.constant 0 : index
    %c0_10 = arith.constant 0 : index
    %28 = vector.load %arg2[%c1, %c0_9, %c0_10] : memref<3x32x32xbf16, #tpu.memory_space<vmem>>, vector<1x32x32xbf16>
    %29 = vector.shape_cast %28 : vector<1x32x32xbf16> to vector<32x32xbf16>
    %30 = arith.truncf %22 : vector<32x128xf32> to vector<32x128xbf16>
    %cst_11 = arith.constant dense<0.000000e+00> : vector<32x128xf32>
    %31 = tpu.matmul %29, %30, %cst_11 {dimension_numbers = #tpu.dot_dimension_numbers<[1], [0], [0], [1], [0, 0, 1, 1], [], []>} : vector<32x32xbf16>, vector<32x128xbf16>, vector<32x128xf32> -> vector<32x128xf32>
    %32 = arith.addf %27, %31 : vector<32x128xf32>
    %c127_i32 = arith.constant 127 : i32
    %33 = tpu.dynamic_rotate %22 by %c127_i32 dim 1 : vector<32x128xf32>, i32 -> vector<32x128xf32>
    %c2 = arith.constant 2 : index
    %c0_12 = arith.constant 0 : index
    %c0_13 = arith.constant 0 : index
    %34 = vector.load %arg2[%c2, %c0_12, %c0_13] : memref<3x32x32xbf16, #tpu.memory_space<vmem>>, vector<1x32x32xbf16>
    %35 = vector.shape_cast %34 : vector<1x32x32xbf16> to vector<32x32xbf16>
    %36 = arith.truncf %33 : vector<32x128xf32> to vector<32x128xbf16>
    %cst_14 = arith.constant dense<0.000000e+00> : vector<32x128xf32>
    %37 = tpu.matmul %35, %36, %cst_14 {dimension_numbers = #tpu.dot_dimension_numbers<[1], [0], [0], [1], [0, 0, 1, 1], [], []>} : vector<32x32xbf16>, vector<32x128xbf16>, vector<32x128xf32> -> vector<32x128xf32>
    %38 = arith.addf %32, %37 : vector<32x128xf32>
    %c0_15 = arith.constant 0 : index
    %c0_16 = arith.constant 0 : index
    %39 = vector.load %arg3[%c0_15, %c0_16] : memref<32x1xf32, #tpu.memory_space<vmem>>, vector<32x1xf32>
    %40 = vector.broadcast %39 : vector<32x1xf32> to vector<32x128xf32>
    %41 = arith.addf %38, %40 : vector<32x128xf32>
    %cst_17 = arith.constant 0.000000e+00 : f32
    %42 = vector.broadcast %cst_17 : f32 to vector<32x128xf32>
    %43 = arith.cmpf oge, %41, %42 : vector<32x128xf32>
    %cst_18 = arith.constant 2.000000e-01 : f32
    %44 = vector.broadcast %cst_18 : f32 to vector<32x128xf32>
    %45 = arith.mulf %44, %41 : vector<32x128xf32>
    %46 = arith.select %43, %41, %45 : vector<32x128xi1>, vector<32x128xf32>
    %cst_19 = arith.constant 1.000000e+00 : f32
    %47 = vector.broadcast %cst_19 : f32 to vector<1x32xf32>
    %48 = arith.mulf %46, %46 : vector<32x128xf32>
    %cst_20 = arith.constant dense<0.000000e+00> : vector<1x128xf32>
    %49 = tpu.matmul %47, %48, %cst_20 {dimension_numbers = #tpu.dot_dimension_numbers<[1], [0], [0], [1], [0, 0, 1, 1], [], []>} : vector<1x32xf32>, vector<32x128xf32>, vector<1x128xf32> -> vector<1x128xf32>
    %cst_21 = arith.constant 3.125000e-02 : f32
    %50 = vector.broadcast %cst_21 : f32 to vector<1x128xf32>
    %51 = arith.mulf %49, %50 : vector<1x128xf32>
    %cst_22 = arith.constant 9.99999993E-9 : f32
    %52 = vector.broadcast %cst_22 : f32 to vector<1x128xf32>
    %53 = arith.addf %51, %52 : vector<1x128xf32>
    %54 = math.rsqrt %53 : vector<1x128xf32>
    %55 = vector.broadcast %54 : vector<1x128xf32> to vector<32x128xf32>
    %56 = arith.mulf %46, %55 : vector<32x128xf32>
    %cst_23 = arith.constant 0.000000e+00 : f32
    %57 = vector.shape_cast %11 : vector<1x128xi1> to vector<1x128xi1>
    %58 = vector.broadcast %57 : vector<1x128xi1> to vector<32x128xi1>
    %59 = vector.broadcast %cst_23 : f32 to vector<32x128xf32>
    %60 = arith.select %58, %56, %59 : vector<32x128xi1>, vector<32x128xf32>
    %c1_i32_24 = arith.constant 1 : i32
    %61 = tpu.dynamic_rotate %60 by %c1_i32_24 dim 1 : vector<32x128xf32>, i32 -> vector<32x128xf32>
    %c0_25 = arith.constant 0 : index
    %c0_26 = arith.constant 0 : index
    %c0_27 = arith.constant 0 : index
    %62 = vector.load %arg4[%c0_25, %c0_26, %c0_27] : memref<3x32x32xbf16, #tpu.memory_space<vmem>>, vector<1x32x32xbf16>
    %63 = vector.shape_cast %62 : vector<1x32x32xbf16> to vector<32x32xbf16>
    %64 = arith.truncf %61 : vector<32x128xf32> to vector<32x128xbf16>
    %cst_28 = arith.constant dense<0.000000e+00> : vector<32x128xf32>
    %65 = tpu.matmul %63, %64, %cst_28 {dimension_numbers = #tpu.dot_dimension_numbers<[1], [0], [0], [1], [0, 0, 1, 1], [], []>} : vector<32x32xbf16>, vector<32x128xbf16>, vector<32x128xf32> -> vector<32x128xf32>
    %c1_29 = arith.constant 1 : index
    %c0_30 = arith.constant 0 : index
    %c0_31 = arith.constant 0 : index
    %66 = vector.load %arg4[%c1_29, %c0_30, %c0_31] : memref<3x32x32xbf16, #tpu.memory_space<vmem>>, vector<1x32x32xbf16>
    %67 = vector.shape_cast %66 : vector<1x32x32xbf16> to vector<32x32xbf16>
    %68 = arith.truncf %60 : vector<32x128xf32> to vector<32x128xbf16>
    %cst_32 = arith.constant dense<0.000000e+00> : vector<32x128xf32>
    %69 = tpu.matmul %67, %68, %cst_32 {dimension_numbers = #tpu.dot_dimension_numbers<[1], [0], [0], [1], [0, 0, 1, 1], [], []>} : vector<32x32xbf16>, vector<32x128xbf16>, vector<32x128xf32> -> vector<32x128xf32>
    %70 = arith.addf %65, %69 : vector<32x128xf32>
    %c127_i32_33 = arith.constant 127 : i32
    %71 = tpu.dynamic_rotate %60 by %c127_i32_33 dim 1 : vector<32x128xf32>, i32 -> vector<32x128xf32>
    %c2_34 = arith.constant 2 : index
    %c0_35 = arith.constant 0 : index
    %c0_36 = arith.constant 0 : index
    %72 = vector.load %arg4[%c2_34, %c0_35, %c0_36] : memref<3x32x32xbf16, #tpu.memory_space<vmem>>, vector<1x32x32xbf16>
    %73 = vector.shape_cast %72 : vector<1x32x32xbf16> to vector<32x32xbf16>
    %74 = arith.truncf %71 : vector<32x128xf32> to vector<32x128xbf16>
    %cst_37 = arith.constant dense<0.000000e+00> : vector<32x128xf32>
    %75 = tpu.matmul %73, %74, %cst_37 {dimension_numbers = #tpu.dot_dimension_numbers<[1], [0], [0], [1], [0, 0, 1, 1], [], []>} : vector<32x32xbf16>, vector<32x128xbf16>, vector<32x128xf32> -> vector<32x128xf32>
    %76 = arith.addf %70, %75 : vector<32x128xf32>
    %c0_38 = arith.constant 0 : index
    %c0_39 = arith.constant 0 : index
    %77 = vector.load %arg5[%c0_38, %c0_39] : memref<32x1xf32, #tpu.memory_space<vmem>>, vector<32x1xf32>
    %78 = vector.broadcast %77 : vector<32x1xf32> to vector<32x128xf32>
    %79 = arith.addf %76, %78 : vector<32x128xf32>
    %cst_40 = arith.constant 0.000000e+00 : f32
    %80 = vector.broadcast %cst_40 : f32 to vector<32x128xf32>
    %81 = arith.cmpf oge, %79, %80 : vector<32x128xf32>
    %cst_41 = arith.constant 2.000000e-01 : f32
    %82 = vector.broadcast %cst_41 : f32 to vector<32x128xf32>
    %83 = arith.mulf %82, %79 : vector<32x128xf32>
    %84 = arith.select %81, %79, %83 : vector<32x128xi1>, vector<32x128xf32>
    %cst_42 = arith.constant 1.000000e+00 : f32
    %85 = vector.broadcast %cst_42 : f32 to vector<1x32xf32>
    %86 = arith.mulf %84, %84 : vector<32x128xf32>
    %cst_43 = arith.constant dense<0.000000e+00> : vector<1x128xf32>
    %87 = tpu.matmul %85, %86, %cst_43 {dimension_numbers = #tpu.dot_dimension_numbers<[1], [0], [0], [1], [0, 0, 1, 1], [], []>} : vector<1x32xf32>, vector<32x128xf32>, vector<1x128xf32> -> vector<1x128xf32>
    %cst_44 = arith.constant 3.125000e-02 : f32
    %88 = vector.broadcast %cst_44 : f32 to vector<1x128xf32>
    %89 = arith.mulf %87, %88 : vector<1x128xf32>
    %cst_45 = arith.constant 9.99999993E-9 : f32
    %90 = vector.broadcast %cst_45 : f32 to vector<1x128xf32>
    %91 = arith.addf %89, %90 : vector<1x128xf32>
    %92 = math.rsqrt %91 : vector<1x128xf32>
    %93 = vector.broadcast %92 : vector<1x128xf32> to vector<32x128xf32>
    %94 = arith.mulf %84, %93 : vector<32x128xf32>
    %c0_46 = arith.constant 0 : index
    %c0_47 = arith.constant 0 : index
    %95 = vector.load %arg6[%c0_46, %c0_47] : memref<4x32xbf16, #tpu.memory_space<vmem>>, vector<4x32xbf16>
    %96 = arith.truncf %94 : vector<32x128xf32> to vector<32x128xbf16>
    %cst_48 = arith.constant dense<0.000000e+00> : vector<4x128xf32>
    %97 = tpu.matmul %95, %96, %cst_48 {dimension_numbers = #tpu.dot_dimension_numbers<[1], [0], [0], [1], [0, 0, 1, 1], [], []>} : vector<4x32xbf16>, vector<32x128xbf16>, vector<4x128xf32> -> vector<4x128xf32>
    %c0_49 = arith.constant 0 : index
    %c0_50 = arith.constant 0 : index
    %98 = vector.load %arg7[%c0_49, %c0_50] : memref<4x1xf32, #tpu.memory_space<vmem>>, vector<4x1xf32>
    %99 = vector.broadcast %98 : vector<4x1xf32> to vector<4x128xf32>
    %100 = arith.addf %97, %99 : vector<4x128xf32>
    %101 = math.tanh %100 : vector<4x128xf32>
    %c0_51 = arith.constant 0 : index
    %c0_52 = arith.constant 0 : index
    %102 = vector.load %arg8[%c0_51, %c0_52] : memref<4x128xf32, #tpu.memory_space<vmem>>, vector<4x128xf32>
    tpu.vector_store %arg8[%c0_51, %c0_52], %101 {strides = array<i32>} : memref<4x128xf32, #tpu.memory_space<vmem>>, vector<4x128xf32>,
    return
  }
  func.func @transform_0(%arg0: i32) -> (i32, i32) {
    %c0_i32 = arith.constant 0 : i32
    %c0_i32_0 = arith.constant 0 : i32
    %c0_i32_1 = arith.constant 0 : i32
    return %c0_i32, %c0_i32_0 : i32, i32
  }
  func.func @transform_1(%arg0: i32) -> (i32, i32, i32) {
    %c0_i32 = arith.constant 0 : i32
    %c0_i32_0 = arith.constant 0 : i32
    %c0_i32_1 = arith.constant 0 : i32
    %c0_i32_2 = arith.constant 0 : i32
    return %c0_i32, %c0_i32_0, %c0_i32_1 : i32, i32, i32
  }
  func.func @transform_2(%arg0: i32) -> (i32, i32) {
    %c0_i32 = arith.constant 0 : i32
    %c0_i32_0 = arith.constant 0 : i32
    %c0_i32_1 = arith.constant 0 : i32
    return %c0_i32, %c0_i32_0 : i32, i32
  }
  func.func @transform_3(%arg0: i32) -> (i32, i32, i32) {
    %c0_i32 = arith.constant 0 : i32
    %c0_i32_0 = arith.constant 0 : i32
    %c0_i32_1 = arith.constant 0 : i32
    %c0_i32_2 = arith.constant 0 : i32
    return %c0_i32, %c0_i32_0, %c0_i32_1 : i32, i32, i32
  }
  func.func @transform_4(%arg0: i32) -> (i32, i32) {
    %c0_i32 = arith.constant 0 : i32
    %c0_i32_0 = arith.constant 0 : i32
    %c0_i32_1 = arith.constant 0 : i32
    return %c0_i32, %c0_i32_0 : i32, i32
  }
  func.func @transform_5(%arg0: i32) -> (i32, i32) {
    %c0_i32 = arith.constant 0 : i32
    %c0_i32_0 = arith.constant 0 : i32
    %c0_i32_1 = arith.constant 0 : i32
    return %c0_i32, %c0_i32_0 : i32, i32
  }
  func.func @transform_6(%arg0: i32) -> (i32, i32) {
    %c0_i32 = arith.constant 0 : i32
    %c0_i32_0 = arith.constant 0 : i32
    %c0_i32_1 = arith.constant 0 : i32
    return %c0_i32, %c0_i32_0 : i32, i32
  }
  func.func @transform_7(%arg0: i32) -> (i32, i32) {
    %c0_i32 = arith.constant 0 : i32
    %c0_i32_0 = arith.constant 0 : i32
    %c0_i32_1 = arith.constant 0 : i32
    return %c0_i32, %c0_i32_0 : i32, i32
  }
}

</mosaic_0001>

<llo_original>
// kernel: generator_forward.1
$region0: #{generator_forward.1}
  #allocation0 [shape = 'u32[]', space=smem, size = 0x4, offset = 0x4, fixed_abs, tag = 'smem constant byte address 0x4 - core index']
  #allocation1 [shape = 'u32[144,128]{1,0:T(1,128)}', space=vmem, size = 0x12000, scoped, tag = 'internal scratch']
  %s0 = inlined_call_operand.vmem [shape: f32[32,128], index: 0, kind: input, shape index: {}]
  %s1 = inlined_call_operand.vmem [shape: bf16[3,32,32], index: 1, kind: input, shape index: {}]
  %s2 = inlined_call_operand.vmem [shape: f32[32,1], index: 2, kind: input, shape index: {}]
  %s3 = inlined_call_operand.vmem [shape: bf16[3,32,32], index: 3, kind: input, shape index: {}]
  %s4 = inlined_call_operand.vmem [shape: f32[32,1], index: 4, kind: input, shape index: {}]
  %s5 = inlined_call_operand.vmem [shape: bf16[4,32], index: 5, kind: input, shape index: {}]
  %s6 = inlined_call_operand.vmem [shape: f32[4,1], index: 6, kind: input, shape index: {}]
  %s7 = inlined_call_operand.vmem [shape: f32[4,128], index: 7, kind: output, shape index: {}]
  %s8 = sld [smem:[#allocation0]]
  $region38: #{generator_forward.1} parent=0
    _
  %s10 = ssub.s32 1, %s8
  %s11 = scalar_select 0, %s10, %s8
  // Predicated region
  $region2: #{generator_forward.1} parent=0 // pred_check
    _
  $region3: #{generator_forward.1} parent=0 // pred_check_branch
    %13 = sbr.rel (0) target = $region5
  $region4: #{generator_forward.1} parent=0 // pred_region
    _
  $region5: #{generator_forward.1} parent=0 // pred_fallthru
    _
  // Predicated region
  $region6: #{generator_forward.1} parent=0 // pred_check
    _
  $region7: #{generator_forward.1} parent=0 // pred_check_branch
    %15 = sbr.rel (0) target = $region9
  $region8: #{generator_forward.1} parent=0 // pred_region
    _
  $region9: #{generator_forward.1} parent=0 // pred_fallthru
    _
  // Predicated region
  $region10: #{generator_forward.1} parent=0 // pred_check
    _
  $region11: #{generator_forward.1} parent=0 // pred_check_branch
    %17 = sbr.rel (0) target = $region13
  $region12: #{generator_forward.1} parent=0 // pred_region
    _
  $region13: #{generator_forward.1} parent=0 // pred_fallthru
    _
  // Predicated region
  $region14: #{generator_forward.1} parent=0 // pred_check
    _
  $region15: #{generator_forward.1} parent=0 // pred_check_branch
    %19 = sbr.rel (0) target = $region17
  $region16: #{generator_forward.1} parent=0 // pred_region
    _
  $region17: #{generator_forward.1} parent=0 // pred_fallthru
    _
  // Predicated region
  $region18: #{generator_forward.1} parent=0 // pred_check
    _
  $region19: #{generator_forward.1} parent=0 // pred_check_branch
    %21 = sbr.rel (0) target = $region21
  $region20: #{generator_forward.1} parent=0 // pred_region
    _
  $region21: #{generator_forward.1} parent=0 // pred_fallthru
    _
  // Predicated region
  $region22: #{generator_forward.1} parent=0 // pred_check
    _
  $region23: #{generator_forward.1} parent=0 // pred_check_branch
    %23 = sbr.rel (0) target = $region25
  $region24: #{generator_forward.1} parent=0 // pred_region
    _
  $region25: #{generator_forward.1} parent=0 // pred_fallthru
    _
  // Predicated region
  $region26: #{generator_forward.1} parent=0 // pred_check
    _
  $region27: #{generator_forward.1} parent=0 // pred_check_branch
    %25 = sbr.rel (0) target = $region29
  $region28: #{generator_forward.1} parent=0 // pred_region
    _
  $region29: #{generator_forward.1} parent=0 // pred_fallthru
    _
  %v27 = vlaneseq
  %v28 = vand.u32 %v27, 127
  %vm29 = vcmp.ge.s32.totalorder %v28, 1
  %vm30 = vcmp.lt.s32.totalorder %v28, 17
  %vm31 = vmand %vm29, %vm30
  %vm32 = vcmp.ge.s32.totalorder %v28, 19
  %vm33 = vcmp.lt.s32.totalorder %v28, 35
  %vm34 = vmand %vm32, %vm33
  %vm35 = vmor %vm31, %vm34
  %v36 = vld [vmem:[%s0] sm:$0xff]
  %v37 = vld [vmem:[%s0 + $0x8] sm:$0xff]
  %v38 = vld [vmem:[%s0 + $0x10] sm:$0xff]
  %v39 = vld [vmem:[%s0 + $0x18] sm:$0xff]
  %v40 = vmul.f32 %v36, %v36
  %v41 = vmul.f32 %v37, %v37
  %v42 = vmul.f32 %v38, %v38
  %v43 = vmul.f32 %v39, %v39
  %vm44 = vcmask 261120
  %v46 = vsel %vm44, 1.0, 0
  %48 = vmatprep.subr.mxu0 0.0
  %49 = vmatpush1.msra.mxu0 %v40
  %50 = vmatprep.subr.mxu0 0.0
  %51 = vmatpush1.msra.mxu0 %v41
  %52 = vmatprep.subr.mxu0 0.0
  %53 = vmatpush1.msra.mxu0 %v42
  %54 = vmatprep.subr.mxu0 0.0
  %55 = vmatpush1.msra.mxu0 %v43
  %56 = vmatprep.subr.mxu0 0.0
  %57 = vmatpush1.msra.mxu0 0.0
  %58 = vmatprep.subr.mxu0 0.0
  %59 = vmatpush1.msra.mxu0 0.0
  %60 = vmatprep.subr.mxu0 0.0
  %61 = vmatpush1.msra.mxu0 0.0
  %62 = vmatprep.subr.mxu0 0.0
  %63 = vmatpush1.msra.mxu0 0.0
  %64 = vmatprep.subr.mxu0 0.0
  %65 = vmatpush1.msra.mxu0 0.0
  %66 = vmatprep.subr.mxu0 0.0
  %67 = vmatpush1.msra.mxu0 0.0
  %68 = vmatprep.subr.mxu0 0.0
  %69 = vmatpush1.msra.mxu0 0.0
  %70 = vmatprep.subr.mxu0 0.0
  %71 = vmatpush1.msra.mxu0 0.0
  %72 = vmatprep.subr.mxu0 0.0
  %73 = vmatpush1.msra.mxu0 0.0
  %74 = vmatprep.subr.mxu0 0.0
  %75 = vmatpush1.msra.mxu0 0.0
  %76 = vmatprep.subr.mxu0 0.0
  %77 = vmatpush1.msra.mxu0 0.0
  %78 = vmatprep.subr.mxu0 0.0
  %79 = vmatpush1.msra.mxu0 0.0
  %80 = vmatprep.subr.mxu0 0.0
  %81 = vmatpush1.msra.mxu0 0.0
  %82 = vmatprep.subr.mxu0 0.0
  %83 = vmatpush1.msra.mxu0 0.0
  %84 = vmatprep.subr.mxu0 0.0
  %85 = vmatpush1.msra.mxu0 0.0
  %86 = vmatprep.subr.mxu0 0.0
  %87 = vmatpush1.msra.mxu0 0.0
  %88 = vmatprep.subr.mxu0 0.0
  %89 = vmatpush1.msra.mxu0 0.0
  %90 = vmatprep.subr.mxu0 0.0
  %91 = vmatpush1.msra.mxu0 0.0
  %92 = vmatprep.subr.mxu0 0.0
  %93 = vmatpush1.msra.mxu0 0.0
  %94 = vmatprep.subr.mxu0 0.0
  %95 = vmatpush1.msra.mxu0 0.0
  %96 = vmatprep.subr.mxu0 0.0
  %97 = vmatpush1.msra.mxu0 0.0
  %98 = vmatprep.subr.mxu0 0.0
  %99 = vmatpush1.msra.mxu0 0.0
  %100 = vmatprep.subr.mxu0 0.0
  %101 = vmatpush1.msra.mxu0 0.0
  %102 = vmatprep.subr.mxu0 0.0
  %103 = vmatpush1.msra.mxu0 0.0
  %104 = vmatprep.subr.mxu0 0.0
  %105 = vmatpush1.msra.mxu0 0.0
  %106 = vmatprep.subr.mxu0 0.0
  %107 = vmatpush1.msra.mxu0 0.0
  %108 = vmatprep.subr.mxu0 0.0
  %109 = vmatpush1.msra.mxu0 0.0
  %110 = vmatprep.subr.mxu0 0.0
  %111 = vmatpush1.msra.mxu0 0.0
  %112 = vmatprep.mubr.f32.mxu0 0.0
  %113 = vmatmul.mubr.f32.gmra.mrb[0].mxu0 %v46
  %v114 = vpop.f32.mrb[0].mxu0
  %v115 = vadd.f32 0.0, %v114
  %v116 = vpop.f32.mrb[0].mxu0
  %117 = vdwg.mxu0
  %v118 = vmul.f32 %v115, 0.03125
  %v119 = vadd.f32 %v118, 1e-08
  %v120 = vrsqrt.pop %v119
  %v121 = vlaneseq
  %v122 = vshrl.u32 %v121, 7
  %v123 = vsub.s32 0, %v122
  %v124 = vrot.slane %v120, %v123
  %v125 = vmul.f32 %v36, %v124
  %v126 = vmul.f32 %v37, %v124
  %v127 = vmul.f32 %v38, %v124
  %v128 = vmul.f32 %v39, %v124
  %129 = vrot.lane.b32.xlu0 %v125, 1
  %v130 = vpop.permute.xlu0 %129
  %131 = vrot.lane.b32.xlu0 %v126, 1
  %v132 = vpop.permute.xlu0 %131
  %133 = vrot.lane.b32.xlu0 %v127, 1
  %v134 = vpop.permute.xlu0 %133
  %135 = vrot.lane.b32.xlu0 %v128, 1
  %v136 = vpop.permute.xlu0 %135
  %v137 = vld [vmem:[%s1] sm:$0xf]
  %v138 = vld [vmem:[%s1 + $0x4] sm:$0xf]
  %v139 = vld [vmem:[%s1 + $0x8] sm:$0xf]
  %v140 = vld [vmem:[%s1 + $0xc] sm:$0xf]
  %v141 = vpack.c.bf16 %v132, %v130
  %v142 = vpack.c.bf16 %v136, %v134
  %s143 = scalar_lea.vmem %s1, 16
  %v144 = vld [vmem:[%s143] sm:$0xf]
  %v145 = vld [vmem:[%s143 + $0x4] sm:$0xf]
  %v146 = vld [vmem:[%s143 + $0x8] sm:$0xf]
  %v147 = vld [vmem:[%s143 + $0xc] sm:$0xf]
  %v148 = vpack.c.bf16 %v126, %v125
  %v149 = vpack.c.bf16 %v128, %v127
  %v154 = vunpack.c.l.b16 %v144
  %v155 = vunpack.c.l.b16 %v145
  %v156 = vunpack.c.l.b16 %v146
  %v157 = vunpack.c.l.b16 %v147
  %v158 = vpack.c.b16 %v155, %v154
  %v159 = vpack.c.b16 %v157, %v156
  %v161 = vsel %vm44, %v158, 0
  %v164 = vsel %vm44, %v159, 0
  %166 = vmatprep.subr.bf16.mxu0 0
  %167 = vmatpush1.bf16.msra.mxu0 %v148
  %168 = vmatprep.subr.bf16.mxu0 0
  %169 = vmatpush1.bf16.msra.mxu0 %v149
  %170 = vmatprep.subr.bf16.mxu0 0
  %171 = vmatpush1.bf16.msra.mxu0 0
  %172 = vmatprep.subr.bf16.mxu0 0
  %173 = vmatpush1.bf16.msra.mxu0 0
  %174 = vmatprep.subr.bf16.mxu0 0
  %175 = vmatpush1.bf16.msra.mxu0 0
  %176 = vmatprep.subr.bf16.mxu0 0
  %177 = vmatpush1.bf16.msra.mxu0 0
  %178 = vmatprep.subr.bf16.mxu0 0
  %179 = vmatpush1.bf16.msra.mxu0 0
  %180 = vmatprep.subr.bf16.mxu0 0
  %181 = vmatpush1.bf16.msra.mxu0 0
  %182 = vmatprep.subr.bf16.mxu0 0
  %183 = vmatpush1.bf16.msra.mxu0 0
  %184 = vmatprep.subr.bf16.mxu0 0
  %185 = vmatpush1.bf16.msra.mxu0 0
  %186 = vmatprep.subr.bf16.mxu0 0
  %187 = vmatpush1.bf16.msra.mxu0 0
  %188 = vmatprep.subr.bf16.mxu0 0
  %189 = vmatpush1.bf16.msra.mxu0 0
  %190 = vmatprep.subr.bf16.mxu0 0
  %191 = vmatpush1.bf16.msra.mxu0 0
  %192 = vmatprep.subr.bf16.mxu0 0
  %193 = vmatpush1.bf16.msra.mxu0 0
  %194 = vmatprep.subr.bf16.mxu0 0
  %195 = vmatpush1.bf16.msra.mxu0 0
  %196 = vmatprep.subr.bf16.mxu0 0
  %197 = vmatpush1.bf16.msra.mxu0 0
  %198 = vmatprep.mubr.bf16.mxu0 0
  %199 = vmatmul.mubr.bf16.gmra.mrb[0].mxu0 %v161
  %v200 = vpop.f32.mrb[0].mxu0
  %v201 = vadd.f32 0.0, %v200
  %v202 = vpop.f32.mrb[0].mxu0
  %v203 = vpop.f32.mrb[0].mxu0
  %v204 = vadd.f32 0.0, %v203
  %v205 = vpop.f32.mrb[0].mxu0
  %206 = vmatprep.mubr.bf16.mxu0 0
  %207 = vmatmul.mubr.bf16.gmra.mrb[0].mxu0 %v164
  %v208 = vpop.f32.mrb[0].mxu0
  %v209 = vadd.f32 0.0, %v208
  %v210 = vpop.f32.mrb[0].mxu0
  %v211 = vpop.f32.mrb[0].mxu0
  %v212 = vadd.f32 0.0, %v211
  %v213 = vpop.f32.mrb[0].mxu0
  %214 = vdwg.mxu0
  %v219 = vunpack.c.l.b16 %v137
  %v220 = vunpack.c.l.b16 %v138
  %v221 = vunpack.c.l.b16 %v139
  %v222 = vunpack.c.l.b16 %v140
  %v223 = vpack.c.b16 %v220, %v219
  %v224 = vpack.c.b16 %v222, %v221
  %v226 = vsel %vm44, %v223, 0
  %v229 = vsel %vm44, %v224, 0
  %231 = vmatprep.subr.bf16.mxu0 0
  %232 = vmatpush1.bf16.msra.mxu0 %v141
  %233 = vmatprep.subr.bf16.mxu0 0
  %234 = vmatpush1.bf16.msra.mxu0 %v142
  %235 = vmatprep.subr.bf16.mxu0 0
  %236 = vmatpush1.bf16.msra.mxu0 0
  %237 = vmatprep.subr.bf16.mxu0 0
  %238 = vmatpush1.bf16.msra.mxu0 0
  %239 = vmatprep.subr.bf16.mxu0 0
  %240 = vmatpush1.bf16.msra.mxu0 0
  %241 = vmatprep.subr.bf16.mxu0 0
  %242 = vmatpush1.bf16.msra.mxu0 0
  %243 = vmatprep.subr.bf16.mxu0 0
  %244 = vmatpush1.bf16.msra.mxu0 0
  %245 = vmatprep.subr.bf16.mxu0 0
  %246 = vmatpush1.bf16.msra.mxu0 0
  %247 = vmatprep.subr.bf16.mxu0 0
  %248 = vmatpush1.bf16.msra.mxu0 0
  %249 = vmatprep.subr.bf16.mxu0 0
  %250 = vmatpush1.bf16.msra.mxu0 0
  %251 = vmatprep.subr.bf16.mxu0 0
  %252 = vmatpush1.bf16.msra.mxu0 0
  %253 = vmatprep.subr.bf16.mxu0 0
  %254 = vmatpush1.bf16.msra.mxu0 0
  %255 = vmatprep.subr.bf16.mxu0 0
  %256 = vmatpush1.bf16.msra.mxu0 0
  %257 = vmatprep.subr.bf16.mxu0 0
  %258 = vmatpush1.bf16.msra.mxu0 0
  %259 = vmatprep.subr.bf16.mxu0 0
  %260 = vmatpush1.bf16.msra.mxu0 0
  %261 = vmatprep.subr.bf16.mxu0 0
  %262 = vmatpush1.bf16.msra.mxu0 0
  %263 = vmatprep.mubr.bf16.mxu0 0
  %264 = vmatmul.mubr.bf16.gmra.mrb[0].mxu0 %v226
  %v265 = vpop.f32.mrb[0].mxu0
  %v266 = vadd.f32 %v201, %v265
  %v267 = vpop.f32.mrb[0].mxu0
  %v268 = vpop.f32.mrb[0].mxu0
  %v269 = vadd.f32 %v204, %v268
  %v270 = vpop.f32.mrb[0].mxu0
  %271 = vmatprep.mubr.bf16.mxu0 0
  %272 = vmatmul.mubr.bf16.gmra.mrb[0].mxu0 %v229
  %v273 = vpop.f32.mrb[0].mxu0
  %v274 = vadd.f32 %v209, %v273
  %v275 = vpop.f32.mrb[0].mxu0
  %v276 = vpop.f32.mrb[0].mxu0
  %v277 = vadd.f32 %v212, %v276
  %v278 = vpop.f32.mrb[0].mxu0
  %279 = vdwg.mxu0
  %280 = vrot.lane.b32.xlu0 %v125, 127
  %v281 = vpop.permute.xlu0 %280
  %282 = vrot.lane.b32.xlu0 %v126, 127
  %v283 = vpop.permute.xlu0 %282
  %284 = vrot.lane.b32.xlu0 %v127, 127
  %v285 = vpop.permute.xlu0 %284
  %286 = vrot.lane.b32.xlu0 %v128, 127
  %v287 = vpop.permute.xlu0 %286
  %s288 = scalar_lea.vmem %s1, 32
  %v289 = vld [vmem:[%s288] sm:$0xf]
  %v290 = vld [vmem:[%s288 + $0x4] sm:$0xf]
  %v291 = vld [vmem:[%s288 + $0x8] sm:$0xf]
  %v292 = vld [vmem:[%s288 + $0xc] sm:$0xf]
  %v293 = vpack.c.bf16 %v283, %v281
  %v294 = vpack.c.bf16 %v287, %v285
  %v299 = vunpack.c.l.b16 %v289
  %v300 = vunpack.c.l.b16 %v290
  %v301 = vunpack.c.l.b16 %v291
  %v302 = vunpack.c.l.b16 %v292
  %v303 = vpack.c.b16 %v300, %v299
  %v304 = vpack.c.b16 %v302, %v301
  %v306 = vsel %vm44, %v303, 0
  %v309 = vsel %vm44, %v304, 0
  %311 = vmatprep.subr.bf16.mxu0 0
  %312 = vmatpush1.bf16.msra.mxu0 %v293
  %313 = vmatprep.subr.bf16.mxu0 0
  %314 = vmatpush1.bf16.msra.mxu0 %v294
  %315 = vmatprep.subr.bf16.mxu0 0
  %316 = vmatpush1.bf16.msra.mxu0 0
  %317 = vmatprep.subr.bf16.mxu0 0
  %318 = vmatpush1.bf16.msra.mxu0 0
  %319 = vmatprep.subr.bf16.mxu0 0
  %320 = vmatpush1.bf16.msra.mxu0 0
  %321 = vmatprep.subr.bf16.mxu0 0
  %322 = vmatpush1.bf16.msra.mxu0 0
  %323 = vmatprep.subr.bf16.mxu0 0
  %324 = vmatpush1.bf16.msra.mxu0 0
  %325 = vmatprep.subr.bf16.mxu0 0
  %326 = vmatpush1.bf16.msra.mxu0 0
  %327 = vmatprep.subr.bf16.mxu0 0
  %328 = vmatpush1.bf16.msra.mxu0 0
  %329 = vmatprep.subr.bf16.mxu0 0
  %330 = vmatpush1.bf16.msra.mxu0 0
  %331 = vmatprep.subr.bf16.mxu0 0
  %332 = vmatpush1.bf16.msra.mxu0 0
  %333 = vmatprep.subr.bf16.mxu0 0
  %334 = vmatpush1.bf16.msra.mxu0 0
  %335 = vmatprep.subr.bf16.mxu0 0
  %336 = vmatpush1.bf16.msra.mxu0 0
  %337 = vmatprep.subr.bf16.mxu0 0
  %338 = vmatpush1.bf16.msra.mxu0 0
  %339 = vmatprep.subr.bf16.mxu0 0
  %340 = vmatpush1.bf16.msra.mxu0 0
  %341 = vmatprep.subr.bf16.mxu0 0
  %342 = vmatpush1.bf16.msra.mxu0 0
  %343 = vmatprep.mubr.bf16.mxu0 0
  %344 = vmatmul.mubr.bf16.gmra.mrb[0].mxu0 %v306
  %v345 = vpop.f32.mrb[0].mxu0
  %v346 = vadd.f32 0.0, %v345
  %v347 = vpop.f32.mrb[0].mxu0
  %v348 = vpop.f32.mrb[0].mxu0
  %v349 = vadd.f32 0.0, %v348
  %v350 = vpop.f32.mrb[0].mxu0
  %351 = vmatprep.mubr.bf16.mxu0 0
  %352 = vmatmul.mubr.bf16.gmra.mrb[0].mxu0 %v309
  %v353 = vpop.f32.mrb[0].mxu0
  %v354 = vadd.f32 0.0, %v353
  %v355 = vpop.f32.mrb[0].mxu0
  %v356 = vpop.f32.mrb[0].mxu0
  %v357 = vadd.f32 0.0, %v356
  %v358 = vpop.f32.mrb[0].mxu0
  %359 = vdwg.mxu0
  %v360 = vadd.f32 %v266, %v346
  %v361 = vadd.f32 %v269, %v349
  %v362 = vadd.f32 %v274, %v354
  %v363 = vadd.f32 %v277, %v357
  %v364 = vld [vmem:[%s2] sm:$0xff]
  %v365 = vld [vmem:[%s2 + $0x8] sm:$0xff]
  %v366 = vld [vmem:[%s2 + $0x10] sm:$0xff]
  %v367 = vld [vmem:[%s2 + $0x18] sm:$0xff]
  %369 = vset.pattern.permute.xlu0 0
  %370 = vperm.xlu0 %369, %v364
  %v371 = vpop.permute.xlu0 %370
  %374 = vset.pattern.permute.xlu0 0
  %375 = vperm.xlu0 %374, %v365
  %v376 = vpop.permute.xlu0 %375
  %379 = vset.pattern.permute.xlu0 0
  %380 = vperm.xlu0 %379, %v366
  %v381 = vpop.permute.xlu0 %380
  %384 = vset.pattern.permute.xlu0 0
  %385 = vperm.xlu0 %384, %v367
  %v386 = vpop.permute.xlu0 %385
  %v388 = vadd.f32 %v360, %v371
  %v389 = vadd.f32 %v361, %v376
  %v390 = vadd.f32 %v362, %v381
  %v391 = vadd.f32 %v363, %v386
  %vm392 = vcmp.ge.f32.partialorder %v388, 0.0
  %vm393 = vcmp.ge.f32.partialorder %v389, 0.0
  %vm394 = vcmp.ge.f32.partialorder %v390, 0.0
  %vm395 = vcmp.ge.f32.partialorder %v391, 0.0
  %v396 = vmul.f32 %v388, 0.2
  %v397 = vmul.f32 %v389, 0.2
  %v398 = vmul.f32 %v390, 0.2
  %v399 = vmul.f32 %v391, 0.2
  %v400 = vsel %vm392, %v388, %v396
  %v401 = vsel %vm393, %v389, %v397
  %v402 = vsel %vm394, %v390, %v398
  %v403 = vsel %vm395, %v391, %v399
  %v404 = vmul.f32 %v400, %v400
  %v405 = vmul.f32 %v401, %v401
  %v406 = vmul.f32 %v402, %v402
  %v407 = vmul.f32 %v403, %v403
  %408 = vmatprep.subr.mxu0 0.0
  %409 = vmatpush1.msra.mxu0 %v404
  %410 = vmatprep.subr.mxu0 0.0
  %411 = vmatpush1.msra.mxu0 %v405
  %412 = vmatprep.subr.mxu0 0.0
  %413 = vmatpush1.msra.mxu0 %v406
  %414 = vmatprep.subr.mxu0 0.0
  %415 = vmatpush1.msra.mxu0 %v407
  %416 = vmatprep.subr.mxu0 0.0
  %417 = vmatpush1.msra.mxu0 0.0
  %418 = vmatprep.subr.mxu0 0.0
  %419 = vmatpush1.msra.mxu0 0.0
  %420 = vmatprep.subr.mxu0 0.0
  %421 = vmatpush1.msra.mxu0 0.0
  %422 = vmatprep.subr.mxu0 0.0
  %423 = vmatpush1.msra.mxu0 0.0
  %424 = vmatprep.subr.mxu0 0.0
  %425 = vmatpush1.msra.mxu0 0.0
  %426 = vmatprep.subr.mxu0 0.0
  %427 = vmatpush1.msra.mxu0 0.0
  %428 = vmatprep.subr.mxu0 0.0
  %429 = vmatpush1.msra.mxu0 0.0
  %430 = vmatprep.subr.mxu0 0.0
  %431 = vmatpush1.msra.mxu0 0.0
  %432 = vmatprep.subr.mxu0 0.0
  %433 = vmatpush1.msra.mxu0 0.0
  %434 = vmatprep.subr.mxu0 0.0
  %435 = vmatpush1.msra.mxu0 0.0
  %436 = vmatprep.subr.mxu0 0.0
  %437 = vmatpush1.msra.mxu0 0.0
  %438 = vmatprep.subr.mxu0 0.0
  %439 = vmatpush1.msra.mxu0 0.0
  %440 = vmatprep.subr.mxu0 0.0
  %441 = vmatpush1.msra.mxu0 0.0
  %442 = vmatprep.subr.mxu0 0.0
  %443 = vmatpush1.msra.mxu0 0.0
  %444 = vmatprep.subr.mxu0 0.0
  %445 = vmatpush1.msra.mxu0 0.0
  %446 = vmatprep.subr.mxu0 0.0
  %447 = vmatpush1.msra.mxu0 0.0
  %448 = vmatprep.subr.mxu0 0.0
  %449 = vmatpush1.msra.mxu0 0.0
  %450 = vmatprep.subr.mxu0 0.0
  %451 = vmatpush1.msra.mxu0 0.0
  %452 = vmatprep.subr.mxu0 0.0
  %453 = vmatpush1.msra.mxu0 0.0
  %454 = vmatprep.subr.mxu0 0.0
  %455 = vmatpush1.msra.mxu0 0.0
  %456 = vmatprep.subr.mxu0 0.0
  %457 = vmatpush1.msra.mxu0 0.0
  %458 = vmatprep.subr.mxu0 0.0
  %459 = vmatpush1.msra.mxu0 0.0
  %460 = vmatprep.subr.mxu0 0.0
  %461 = vmatpush1.msra.mxu0 0.0
  %462 = vmatprep.subr.mxu0 0.0
  %463 = vmatpush1.msra.mxu0 0.0
  %464 = vmatprep.subr.mxu0 0.0
  %465 = vmatpush1.msra.mxu0 0.0
  %466 = vmatprep.subr.mxu0 0.0
  %467 = vmatpush1.msra.mxu0 0.0
  %468 = vmatprep.subr.mxu0 0.0
  %469 = vmatpush1.msra.mxu0 0.0
  %470 = vmatprep.subr.mxu0 0.0
  %471 = vmatpush1.msra.mxu0 0.0
  %472 = vmatprep.mubr.f32.mxu0 0.0
  %473 = vmatmul.mubr.f32.gmra.mrb[0].mxu0 %v46
  %v474 = vpop.f32.mrb[0].mxu0
  %v475 = vadd.f32 0.0, %v474
  %v476 = vpop.f32.mrb[0].mxu0
  %477 = vdwg.mxu0
  %v478 = vmul.f32 %v475, 0.03125
  %v479 = vadd.f32 %v478, 1e-08
  %v480 = vrsqrt.pop %v479
  %v481 = vlaneseq
  %v482 = vshrl.u32 %v481, 7
  %v483 = vsub.s32 0, %v482
  %v484 = vrot.slane %v480, %v483
  %v485 = vmul.f32 %v400, %v484
  %v486 = vmul.f32 %v401, %v484
  %v487 = vmul.f32 %v402, %v484
  %v488 = vmul.f32 %v403, %v484
  %v489 = vsel %vm35, 1, 0
  %vm490 = vcmp.eq.s32.totalorder %v489, 1
  %v491 = vsel %vm490, %v485, 0.0
  %v492 = vsel %vm490, %v486, 0.0
  %v493 = vsel %vm490, %v487, 0.0
  %v494 = vsel %vm490, %v488, 0.0
  %495 = vrot.lane.b32.xlu0 %v491, 1
  %v496 = vpop.permute.xlu0 %495
  %497 = vrot.lane.b32.xlu0 %v492, 1
  %v498 = vpop.permute.xlu0 %497
  %499 = vrot.lane.b32.xlu0 %v493, 1
  %v500 = vpop.permute.xlu0 %499
  %501 = vrot.lane.b32.xlu0 %v494, 1
  %v502 = vpop.permute.xlu0 %501
  %v503 = vld [vmem:[%s3] sm:$0xf]
  %v504 = vld [vmem:[%s3 + $0x4] sm:$0xf]
  %v505 = vld [vmem:[%s3 + $0x8] sm:$0xf]
  %v506 = vld [vmem:[%s3 + $0xc] sm:$0xf]
  %v507 = vpack.c.bf16 %v498, %v496
  %v508 = vpack.c.bf16 %v502, %v500
  %s509 = scalar_lea.vmem %s3, 16
  %v510 = vld [vmem:[%s509] sm:$0xf]
  %v511 = vld [vmem:[%s509 + $0x4] sm:$0xf]
  %v512 = vld [vmem:[%s509 + $0x8] sm:$0xf]
  %v513 = vld [vmem:[%s509 + $0xc] sm:$0xf]
  %v514 = vpack.c.bf16 %v492, %v491
  %v515 = vpack.c.bf16 %v494, %v493
  %v520 = vunpack.c.l.b16 %v510
  %v521 = vunpack.c.l.b16 %v511
  %v522 = vunpack.c.l.b16 %v512
  %v523 = vunpack.c.l.b16 %v513
  %v524 = vpack.c.b16 %v521, %v520
  %v525 = vpack.c.b16 %v523, %v522
  %v527 = vsel %vm44, %v524, 0
  %v530 = vsel %vm44, %v525, 0
  %532 = vmatprep.subr.bf16.mxu0 0
  %533 = vmatpush1.bf16.msra.mxu0 %v514
  %534 = vmatprep.subr.bf16.mxu0 0
  %535 = vmatpush1.bf16.msra.mxu0 %v515
  %536 = vmatprep.subr.bf16.mxu0 0
  %537 = vmatpush1.bf16.msra.mxu0 0
  %538 = vmatprep.subr.bf16.mxu0 0
  %539 = vmatpush1.bf16.msra.mxu0 0
  %540 = vmatprep.subr.bf16.mxu0 0
  %541 = vmatpush1.bf16.msra.mxu0 0
  %542 = vmatprep.subr.bf16.mxu0 0
  %543 = vmatpush1.bf16.msra.mxu0 0
  %544 = vmatprep.subr.bf16.mxu0 0
  %545 = vmatpush1.bf16.msra.mxu0 0
  %546 = vmatprep.subr.bf16.mxu0 0
  %547 = vmatpush1.bf16.msra.mxu0 0
  %548 = vmatprep.subr.bf16.mxu0 0
  %549 = vmatpush1.bf16.msra.mxu0 0
  %550 = vmatprep.subr.bf16.mxu0 0
  %551 = vmatpush1.bf16.msra.mxu0 0
  %552 = vmatprep.subr.bf16.mxu0 0
  %553 = vmatpush1.bf16.msra.mxu0 0
  %554 = vmatprep.subr.bf16.mxu0 0
  %555 = vmatpush1.bf16.msra.mxu0 0
  %556 = vmatprep.subr.bf16.mxu0 0
  %557 = vmatpush1.bf16.msra.mxu0 0
  %558 = vmatprep.subr.bf16.mxu0 0
  %559 = vmatpush1.bf16.msra.mxu0 0
  %560 = vmatprep.subr.bf16.mxu0 0
  %561 = vmatpush1.bf16.msra.mxu0 0
  %562 = vmatprep.subr.bf16.mxu0 0
  %563 = vmatpush1.bf16.msra.mxu0 0
  %564 = vmatprep.mubr.bf16.mxu0 0
  %565 = vmatmul.mubr.bf16.gmra.mrb[0].mxu0 %v527
  %v566 = vpop.f32.mrb[0].mxu0
  %v567 = vadd.f32 0.0, %v566
  %v568 = vpop.f32.mrb[0].mxu0
  %v569 = vpop.f32.mrb[0].mxu0
  %v570 = vadd.f32 0.0, %v569
  %v571 = vpop.f32.mrb[0].mxu0
  %572 = vmatprep.mubr.bf16.mxu0 0
  %573 = vmatmul.mubr.bf16.gmra.mrb[0].mxu0 %v530
  %v574 = vpop.f32.mrb[0].mxu0
  %v575 = vadd.f32 0.0, %v574
  %v576 = vpop.f32.mrb[0].mxu0
  %v577 = vpop.f32.mrb[0].mxu0
  %v578 = vadd.f32 0.0, %v577
  %v579 = vpop.f32.mrb[0].mxu0
  %580 = vdwg.mxu0
  %v585 = vunpack.c.l.b16 %v503
  %v586 = vunpack.c.l.b16 %v504
  %v587 = vunpack.c.l.b16 %v505
  %v588 = vunpack.c.l.b16 %v506
  %v589 = vpack.c.b16 %v586, %v585
  %v590 = vpack.c.b16 %v588, %v587
  %v592 = vsel %vm44, %v589, 0
  %v595 = vsel %vm44, %v590, 0
  %597 = vmatprep.subr.bf16.mxu0 0
  %598 = vmatpush1.bf16.msra.mxu0 %v507
  %599 = vmatprep.subr.bf16.mxu0 0
  %600 = vmatpush1.bf16.msra.mxu0 %v508
  %601 = vmatprep.subr.bf16.mxu0 0
  %602 = vmatpush1.bf16.msra.mxu0 0
  %603 = vmatprep.subr.bf16.mxu0 0
  %604 = vmatpush1.bf16.msra.mxu0 0
  %605 = vmatprep.subr.bf16.mxu0 0
  %606 = vmatpush1.bf16.msra.mxu0 0
  %607 = vmatprep.subr.bf16.mxu0 0
  %608 = vmatpush1.bf16.msra.mxu0 0
  %609 = vmatprep.subr.bf16.mxu0 0
  %610 = vmatpush1.bf16.msra.mxu0 0
  %611 = vmatprep.subr.bf16.mxu0 0
  %612 = vmatpush1.bf16.msra.mxu0 0
  %613 = vmatprep.subr.bf16.mxu0 0
  %614 = vmatpush1.bf16.msra.mxu0 0
  %615 = vmatprep.subr.bf16.mxu0 0
  %616 = vmatpush1.bf16.msra.mxu0 0
  %617 = vmatprep.subr.bf16.mxu0 0
  %618 = vmatpush1.bf16.msra.mxu0 0
  %619 = vmatprep.subr.bf16.mxu0 0
  %620 = vmatpush1.bf16.msra.mxu0 0
  %621 = vmatprep.subr.bf16.mxu0 0
  %622 = vmatpush1.bf16.msra.mxu0 0
  %623 = vmatprep.subr.bf16.mxu0 0
  %624 = vmatpush1.bf16.msra.mxu0 0
  %625 = vmatprep.subr.bf16.mxu0 0
  %626 = vmatpush1.bf16.msra.mxu0 0
  %627 = vmatprep.subr.bf16.mxu0 0
  %628 = vmatpush1.bf16.msra.mxu0 0
  %629 = vmatprep.mubr.bf16.mxu0 0
  %630 = vmatmul.mubr.bf16.gmra.mrb[0].mxu0 %v592
  %v631 = vpop.f32.mrb[0].mxu0
  %v632 = vadd.f32 %v567, %v631
  %v633 = vpop.f32.mrb[0].mxu0
  %v634 = vpop.f32.mrb[0].mxu0
  %v635 = vadd.f32 %v570, %v634
  %v636 = vpop.f32.mrb[0].mxu0
  %637 = vmatprep.mubr.bf16.mxu0 0
  %638 = vmatmul.mubr.bf16.gmra.mrb[0].mxu0 %v595
  %v639 = vpop.f32.mrb[0].mxu0
  %v640 = vadd.f32 %v575, %v639
  %v641 = vpop.f32.mrb[0].mxu0
  %v642 = vpop.f32.mrb[0].mxu0
  %v643 = vadd.f32 %v578, %v642
  %v644 = vpop.f32.mrb[0].mxu0
  %645 = vdwg.mxu0
  %646 = vrot.lane.b32.xlu0 %v491, 127
  %v647 = vpop.permute.xlu0 %646
  %648 = vrot.lane.b32.xlu0 %v492, 127
  %v649 = vpop.permute.xlu0 %648
  %650 = vrot.lane.b32.xlu0 %v493, 127
  %v651 = vpop.permute.xlu0 %650
  %652 = vrot.lane.b32.xlu0 %v494, 127
  %v653 = vpop.permute.xlu0 %652
  %s654 = scalar_lea.vmem %s3, 32
  %v655 = vld [vmem:[%s654] sm:$0xf]
  %v656 = vld [vmem:[%s654 + $0x4] sm:$0xf]
  %v657 = vld [vmem:[%s654 + $0x8] sm:$0xf]
  %v658 = vld [vmem:[%s654 + $0xc] sm:$0xf]
  %v659 = vpack.c.bf16 %v649, %v647
  %v660 = vpack.c.bf16 %v653, %v651
  %v665 = vunpack.c.l.b16 %v655
  %v666 = vunpack.c.l.b16 %v656
  %v667 = vunpack.c.l.b16 %v657
  %v668 = vunpack.c.l.b16 %v658
  %v669 = vpack.c.b16 %v666, %v665
  %v670 = vpack.c.b16 %v668, %v667
  %v672 = vsel %vm44, %v669, 0
  %v675 = vsel %vm44, %v670, 0
  %677 = vmatprep.subr.bf16.mxu0 0
  %678 = vmatpush1.bf16.msra.mxu0 %v659
  %679 = vmatprep.subr.bf16.mxu0 0
  %680 = vmatpush1.bf16.msra.mxu0 %v660
  %681 = vmatprep.subr.bf16.mxu0 0
  %682 = vmatpush1.bf16.msra.mxu0 0
  %683 = vmatprep.subr.bf16.mxu0 0
  %684 = vmatpush1.bf16.msra.mxu0 0
  %685 = vmatprep.subr.bf16.mxu0 0
  %686 = vmatpush1.bf16.msra.mxu0 0
  %687 = vmatprep.subr.bf16.mxu0 0
  %688 = vmatpush1.bf16.msra.mxu0 0
  %689 = vmatprep.subr.bf16.mxu0 0
  %690 = vmatpush1.bf16.msra.mxu0 0
  %691 = vmatprep.subr.bf16.mxu0 0
  %692 = vmatpush1.bf16.msra.mxu0 0
  %693 = vmatprep.subr.bf16.mxu0 0
  %694 = vmatpush1.bf16.msra.mxu0 0
  %695 = vmatprep.subr.bf16.mxu0 0
  %696 = vmatpush1.bf16.msra.mxu0 0
  %697 = vmatprep.subr.bf16.mxu0 0
  %698 = vmatpush1.bf16.msra.mxu0 0
  %699 = vmatprep.subr.bf16.mxu0 0
  %700 = vmatpush1.bf16.msra.mxu0 0
  %701 = vmatprep.subr.bf16.mxu0 0
  %702 = vmatpush1.bf16.msra.mxu0 0
  %703 = vmatprep.subr.bf16.mxu0 0
  %704 = vmatpush1.bf16.msra.mxu0 0
  %705 = vmatprep.subr.bf16.mxu0 0
  %706 = vmatpush1.bf16.msra.mxu0 0
  %707 = vmatprep.subr.bf16.mxu0 0
  %708 = vmatpush1.bf16.msra.mxu0 0
  %709 = vmatprep.mubr.bf16.mxu0 0
  %710 = vmatmul.mubr.bf16.gmra.mrb[0].mxu0 %v672
  %v711 = vpop.f32.mrb[0].mxu0
  %v712 = vadd.f32 0.0, %v711
  %v713 = vpop.f32.mrb[0].mxu0
  %v714 = vpop.f32.mrb[0].mxu0
  %v715 = vadd.f32 0.0, %v714
  %v716 = vpop.f32.mrb[0].mxu0
  %717 = vmatprep.mubr.bf16.mxu0 0
  %718 = vmatmul.mubr.bf16.gmra.mrb[0].mxu0 %v675
  %v719 = vpop.f32.mrb[0].mxu0
  %v720 = vadd.f32 0.0, %v719
  %v721 = vpop.f32.mrb[0].mxu0
  %v722 = vpop.f32.mrb[0].mxu0
  %v723 = vadd.f32 0.0, %v722
  %v724 = vpop.f32.mrb[0].mxu0
  %725 = vdwg.mxu0
  %v726 = vadd.f32 %v632, %v712
  %v727 = vadd.f32 %v635, %v715
  %v728 = vadd.f32 %v640, %v720
  %v729 = vadd.f32 %v643, %v723
  %v730 = vld [vmem:[%s4] sm:$0xff]
  %v731 = vld [vmem:[%s4 + $0x8] sm:$0xff]
  %v732 = vld [vmem:[%s4 + $0x10] sm:$0xff]
  %v733 = vld [vmem:[%s4 + $0x18] sm:$0xff]
  %735 = vset.pattern.permute.xlu0 0
  %736 = vperm.xlu0 %735, %v730
  %v737 = vpop.permute.xlu0 %736
  %740 = vset.pattern.permute.xlu0 0
  %741 = vperm.xlu0 %740, %v731
  %v742 = vpop.permute.xlu0 %741
  %745 = vset.pattern.permute.xlu0 0
  %746 = vperm.xlu0 %745, %v732
  %v747 = vpop.permute.xlu0 %746
  %750 = vset.pattern.permute.xlu0 0
  %751 = vperm.xlu0 %750, %v733
  %v752 = vpop.permute.xlu0 %751
  %v754 = vadd.f32 %v726, %v737
  %v755 = vadd.f32 %v727, %v742
  %v756 = vadd.f32 %v728, %v747
  %v757 = vadd.f32 %v729, %v752
  %vm758 = vcmp.ge.f32.partialorder %v754, 0.0
  %vm759 = vcmp.ge.f32.partialorder %v755, 0.0
  %vm760 = vcmp.ge.f32.partialorder %v756, 0.0
  %vm761 = vcmp.ge.f32.partialorder %v757, 0.0
  %v762 = vmul.f32 %v754, 0.2
  %v763 = vmul.f32 %v755, 0.2
  %v764 = vmul.f32 %v756, 0.2
  %v765 = vmul.f32 %v757, 0.2
  %v766 = vsel %vm758, %v754, %v762
  %v767 = vsel %vm759, %v755, %v763
  %v768 = vsel %vm760, %v756, %v764
  %v769 = vsel %vm761, %v757, %v765
  %v770 = vmul.f32 %v766, %v766
  %v771 = vmul.f32 %v767, %v767
  %v772 = vmul.f32 %v768, %v768
  %v773 = vmul.f32 %v769, %v769
  %774 = vmatprep.subr.mxu0 0.0
  %775 = vmatpush1.msra.mxu0 %v770
  %776 = vmatprep.subr.mxu0 0.0
  %777 = vmatpush1.msra.mxu0 %v771
  %778 = vmatprep.subr.mxu0 0.0
  %779 = vmatpush1.msra.mxu0 %v772
  %780 = vmatprep.subr.mxu0 0.0
  %781 = vmatpush1.msra.mxu0 %v773
  %782 = vmatprep.subr.mxu0 0.0
  %783 = vmatpush1.msra.mxu0 0.0
  %784 = vmatprep.subr.mxu0 0.0
  %785 = vmatpush1.msra.mxu0 0.0
  %786 = vmatprep.subr.mxu0 0.0
  %787 = vmatpush1.msra.mxu0 0.0
  %788 = vmatprep.subr.mxu0 0.0
  %789 = vmatpush1.msra.mxu0 0.0
  %790 = vmatprep.subr.mxu0 0.0
  %791 = vmatpush1.msra.mxu0 0.0
  %792 = vmatprep.subr.mxu0 0.0
  %793 = vmatpush1.msra.mxu0 0.0
  %794 = vmatprep.subr.mxu0 0.0
  %795 = vmatpush1.msra.mxu0 0.0
  %796 = vmatprep.subr.mxu0 0.0
  %797 = vmatpush1.msra.mxu0 0.0
  %798 = vmatprep.subr.mxu0 0.0
  %799 = vmatpush1.msra.mxu0 0.0
  %800 = vmatprep.subr.mxu0 0.0
  %801 = vmatpush1.msra.mxu0 0.0
  %802 = vmatprep.subr.mxu0 0.0
  %803 = vmatpush1.msra.mxu0 0.0
  %804 = vmatprep.subr.mxu0 0.0
  %805 = vmatpush1.msra.mxu0 0.0
  %806 = vmatprep.subr.mxu0 0.0
  %807 = vmatpush1.msra.mxu0 0.0
  %808 = vmatprep.subr.mxu0 0.0
  %809 = vmatpush1.msra.mxu0 0.0
  %810 = vmatprep.subr.mxu0 0.0
  %811 = vmatpush1.msra.mxu0 0.0
  %812 = vmatprep.subr.mxu0 0.0
  %813 = vmatpush1.msra.mxu0 0.0
  %814 = vmatprep.subr.mxu0 0.0
  %815 = vmatpush1.msra.mxu0 0.0
  %816 = vmatprep.subr.mxu0 0.0
  %817 = vmatpush1.msra.mxu0 0.0
  %818 = vmatprep.subr.mxu0 0.0
  %819 = vmatpush1.msra.mxu0 0.0
  %820 = vmatprep.subr.mxu0 0.0
  %821 = vmatpush1.msra.mxu0 0.0
  %822 = vmatprep.subr.mxu0 0.0
  %823 = vmatpush1.msra.mxu0 0.0
  %824 = vmatprep.subr.mxu0 0.0
  %825 = vmatpush1.msra.mxu0 0.0
  %826 = vmatprep.subr.mxu0 0.0
  %827 = vmatpush1.msra.mxu0 0.0
  %828 = vmatprep.subr.mxu0 0.0
  %829 = vmatpush1.msra.mxu0 0.0
  %830 = vmatprep.subr.mxu0 0.0
  %831 = vmatpush1.msra.mxu0 0.0
  %832 = vmatprep.subr.mxu0 0.0
  %833 = vmatpush1.msra.mxu0 0.0
  %834 = vmatprep.subr.mxu0 0.0
  %835 = vmatpush1.msra.mxu0 0.0
  %836 = vmatprep.subr.mxu0 0.0
  %837 = vmatpush1.msra.mxu0 0.0
  %838 = vmatprep.mubr.f32.mxu0 0.0
  %839 = vmatmul.mubr.f32.gmra.mrb[0].mxu0 %v46
  %v840 = vpop.f32.mrb[0].mxu0
  %v841 = vadd.f32 0.0, %v840
  %v842 = vpop.f32.mrb[0].mxu0
  %843 = vdwg.mxu0
  %v844 = vmul.f32 %v841, 0.03125
  %v845 = vadd.f32 %v844, 1e-08
  %v846 = vrsqrt.pop %v845
  %v847 = vlaneseq
  %v848 = vshrl.u32 %v847, 7
  %v849 = vsub.s32 0, %v848
  %v850 = vrot.slane %v846, %v849
  %v851 = vmul.f32 %v766, %v850
  %v852 = vmul.f32 %v767, %v850
  %v853 = vmul.f32 %v768, %v850
  %v854 = vmul.f32 %v769, %v850
  %v855 = vld [vmem:[%s5] sm:$0x3]
  %v856 = vpack.c.bf16 %v852, %v851
  %v857 = vpack.c.bf16 %v854, %v853
  %v858 = vld [vmem:[%s6] sm:$0xf]
  %860 = vset.pattern.permute.xlu0 0
  %861 = vperm.xlu0 %860, %v858
  %v862 = vpop.permute.xlu0 %861
  %v865 = vsel %vm44, %v855, 0
  %867 = vmatprep.subr.bf16.mxu0 0
  %868 = vmatpush1.bf16.msra.mxu0 %v856
  %869 = vmatprep.subr.bf16.mxu0 0
  %870 = vmatpush1.bf16.msra.mxu0 %v857
  %871 = vmatprep.subr.bf16.mxu0 0
  %872 = vmatpush1.bf16.msra.mxu0 0
  %873 = vmatprep.subr.bf16.mxu0 0
  %874 = vmatpush1.bf16.msra.mxu0 0
  %875 = vmatprep.subr.bf16.mxu0 0
  %876 = vmatpush1.bf16.msra.mxu0 0
  %877 = vmatprep.subr.bf16.mxu0 0
  %878 = vmatpush1.bf16.msra.mxu0 0
  %879 = vmatprep.subr.bf16.mxu0 0
  %880 = vmatpush1.bf16.msra.mxu0 0
  %881 = vmatprep.subr.bf16.mxu0 0
  %882 = vmatpush1.bf16.msra.mxu0 0
  %883 = vmatprep.subr.bf16.mxu0 0
  %884 = vmatpush1.bf16.msra.mxu0 0
  %885 = vmatprep.subr.bf16.mxu0 0
  %886 = vmatpush1.bf16.msra.mxu0 0
  %887 = vmatprep.subr.bf16.mxu0 0
  %888 = vmatpush1.bf16.msra.mxu0 0
  %889 = vmatprep.subr.bf16.mxu0 0
  %890 = vmatpush1.bf16.msra.mxu0 0
  %891 = vmatprep.subr.bf16.mxu0 0
  %892 = vmatpush1.bf16.msra.mxu0 0
  %893 = vmatprep.subr.bf16.mxu0 0
  %894 = vmatpush1.bf16.msra.mxu0 0
  %895 = vmatprep.subr.bf16.mxu0 0
  %896 = vmatpush1.bf16.msra.mxu0 0
  %897 = vmatprep.subr.bf16.mxu0 0
  %898 = vmatpush1.bf16.msra.mxu0 0
  %899 = vmatprep.mubr.bf16.mxu0 0
  %900 = vmatmul.mubr.bf16.gmra.mrb[0].mxu0 %v865
  %v901 = vpop.f32.mrb[0].mxu0
  %v902 = vadd.f32 %v862, %v901
  %v903 = vpop.f32.mrb[0].mxu0
  %v904 = vpop.f32.mrb[0].mxu0
  %v905 = vpop.f32.mrb[0].mxu0
  %906 = vdwg.mxu0
  %v907 = vtanh.pop %v902
  %908 = vst [vmem:[%s7] sm:$0xf] %v907
  // Predicated region
  $region30: #{generator_forward.1} parent=0 // pred_check
    _
  $region31: #{generator_forward.1} parent=0 // pred_check_branch
    %910 = sbr.rel (0) target = $region33
  $region32: #{generator_forward.1} parent=0 // pred_region
    _
  $region33: #{generator_forward.1} parent=0 // pred_fallthru
    _
  // Predicated region
  $region34: #{generator_forward.1} parent=0 // pred_check
    _
  $region35: #{generator_forward.1} parent=0 // pred_check_branch
    %912 = sbr.rel (0) target = $region37
  $region36: #{generator_forward.1} parent=0 // pred_region
    _
  $region37: #{generator_forward.1} parent=0 // pred_fallthru
    _

</llo_original>
